<compile_context>
chip_gen: v7x
topology: tpu7x:2x2x1
jax: 0.10.0
libtpu: 0.0.40
codegen_flags: <defaults>
</compile_context>

<pallas_src>
import jax
import jax.numpy as jnp
from jax.experimental import pallas as pl
from jax.experimental.pallas import tpu as pltpu


def _mean_act_kernel(x_ref, o_ref):
    x = x_ref[...]
    y = jnp.exp(x)
    o_ref[...] = jnp.clip(y, 0.001, 1000.0)


def mean_act(x, *, target_tile_bytes=8 * 1024 * 1024):
    """Elementwise clamp(exp(x), 0.001, 1000.0) via Pallas.

    Accepts any-rank input (flattened to 2-D internally); last dim maps to the
    128-lane axis and is kept full-width per block (lane-dense stores).
    """
    orig_shape = x.shape
    if x.ndim == 0:
        x2 = x.reshape(1, 1)
    elif x.ndim == 1:
        x2 = x.reshape(1, -1)
    else:
        x2 = x.reshape(-1, orig_shape[-1])

    M, N = x2.shape
    itemsize = jnp.dtype(x.dtype).itemsize
    row_bytes = max(N * itemsize, 1)

    # Row tile: ~target_tile_bytes per block, multiple of 8 sublanes, <= 1024 rows.
    tm = max(8, (target_tile_bytes // row_bytes) // 8 * 8)
    tm = min(tm, 1024)
    m_padded = ((M + 7) // 8) * 8
    tm = min(tm, m_padded)
    # Pad rows so the 1-D grid divides evenly (keeps blocks (8,*)-aligned).
    m_padded = ((M + tm - 1) // tm) * tm
    if m_padded != M:
        x2 = jnp.pad(x2, ((0, m_padded - M), (0, 0)))

    grid = (m_padded // tm,)

    # Double-buffered input + output = 4 × tile_bytes; add headroom, stay < 48 MiB
    # so it fits v7x's 64 MiB physical VMEM (and v5e/v6e defaults are never exceeded).
    tile_bytes = tm * N * itemsize
    vmem_limit = int(min(max(4 * tile_bytes + (4 << 20), 32 << 20), 48 << 20))

    out = pl.pallas_call(
        _mean_act_kernel,
        out_shape=jax.ShapeDtypeStruct((m_padded, N), x.dtype),
        grid_spec=pltpu.PrefetchScalarGridSpec(
            num_scalar_prefetch=0,
            grid=grid,
            in_specs=[pl.BlockSpec((tm, N), lambda i: (i, 0))],
            out_specs=pl.BlockSpec((tm, N), lambda i: (i, 0)),
        ),
        compiler_params=pltpu.CompilerParams(
            dimension_semantics=("parallel",),
            vmem_limit_bytes=vmem_limit,
        ),
    )(x2)

    if m_padded != M:
        out = out[:M]
    return out.reshape(orig_shape)


if __name__ == "__main__":
    key = jax.random.PRNGKey(0)

    # Small shape consistent with typical use (batch of decoder outputs): single-tile path.
    x_small = jax.random.normal(key, (8, 256), dtype=jnp.float32)
    out_small = jax.block_until_ready(mean_act(x_small))
    ref_small = jnp.clip(jnp.exp(x_small), 0.001, 1000.0)
    assert out_small.shape == ref_small.shape and out_small.dtype == ref_small.dtype
    assert jnp.allclose(out_small, ref_small, rtol=1e-6, atol=1e-6)

    # Larger, non-tile-divisible row count: exercises padding, multi-tile grid,
    # and (on v7x) sharding of the parallel row axis across both TensorCores.
    k2 = jax.random.PRNGKey(1)
    x_big = jax.random.normal(k2, (1030, 384), dtype=jnp.float32) * 4.0
    out_big = jax.block_until_ready(mean_act(x_big))
    ref_big = jnp.clip(jnp.exp(x_big), 0.001, 1000.0)
    assert out_big.shape == ref_big.shape and out_big.dtype == ref_big.dtype
    assert jnp.allclose(out_big, ref_big, rtol=1e-6, atol=1e-6)

    print("KERNEL_OK")
</pallas_src>

<mosaic_0001>
module attributes {stable_mosaic.version = 11 : i64} {
  func.func @_mean_act_kernel(%arg0: i32, %arg1: memref<8x256xf32, #tpu.memory_space<vmem>>, %arg2: memref<8x256xf32, #tpu.memory_space<vmem>>) attributes {dimension_semantics = [#tpu.dimension_semantics<parallel>], iteration_bounds = array<i64: 1>, scalar_prefetch = 0 : i64, scratch_operands = 0 : i64, tpu.core_type = #tpu.core_type<tc>, window_params = [{transform_indices = @transform_0, window_bounds = array<i64: 8, 256>}, {transform_indices = @transform_1, window_bounds = array<i64: 8, 256>}]} {
    %c0 = arith.constant 0 : index
    %c0_0 = arith.constant 0 : index
    %0 = vector.load %arg1[%c0, %c0_0] : memref<8x256xf32, #tpu.memory_space<vmem>>, vector<8x256xf32>
    %1 = math.exp %0 : vector<8x256xf32>
    %cst = arith.constant 1.000000e-03 : f32
    %cst_1 = arith.constant 1.000000e+03 : f32
    %2 = vector.broadcast %cst : f32 to vector<8x256xf32>
    %3 = arith.maximumf %2, %1 : vector<8x256xf32>
    %4 = vector.broadcast %cst_1 : f32 to vector<8x256xf32>
    %5 = arith.minimumf %4, %3 : vector<8x256xf32>
    %c0_2 = arith.constant 0 : index
    %c0_3 = arith.constant 0 : index
    %6 = vector.load %arg2[%c0_2, %c0_3] : memref<8x256xf32, #tpu.memory_space<vmem>>, vector<8x256xf32>
    tpu.vector_store %arg2[%c0_2, %c0_3], %5 {strides = array<i32>} : memref<8x256xf32, #tpu.memory_space<vmem>>, vector<8x256xf32>,
    return
  }
  func.func @transform_0(%arg0: i32) -> (i32, i32) {
    %c0_i32 = arith.constant 0 : i32
    %c0_i32_0 = arith.constant 0 : i32
    return %arg0, %c0_i32 : i32, i32
  }
  func.func @transform_1(%arg0: i32) -> (i32, i32) {
    %c0_i32 = arith.constant 0 : i32
    %c0_i32_0 = arith.constant 0 : i32
    return %arg0, %c0_i32 : i32, i32
  }
}

</mosaic_0001>

<llo_original>
// kernel: tpu_custom_call.1
$region0: #{tpu_custom_call.1}
  #allocation0 [shape = 'u32[]', space=smem, size = 0x4, offset = 0x4, fixed_abs, tag = 'smem constant byte address 0x4 - core index']
  #allocation1 [shape = 'u32[144,128]{1,0:T(1,128)}', space=vmem, size = 0x12000, scoped, tag = 'internal scratch']
  %s0 = inlined_call_operand.hbm [shape: f32[8,256], index: 0, kind: input, shape index: {}]
  %s1 = inlined_call_operand.hbm [shape: f32[8,256], index: 1, kind: output, shape index: {}]
  %s2 = sld [smem:[#allocation0]]
  $region18: #{tpu_custom_call.1} parent=0
    _
  %s4 = ssub.s32 1, %s2
  %s5 = scalar_select 0, %s4, %s2
  $region1: #{tpu_custom_call.1} parent=0
    #allocation2 [shape = 'u8[8192]{0}', space=vmem, size = 0x2000, scoped, tag = 'input window, operand 0, single buffered']
    #allocation3 [shape = 's32[1]{0}', space=sflag, size = 0x4, scoped, tag = 'scoped memory for tpu_custom_call.1']
    #allocation4 [shape = 's32[1]{0}', space=sflag, size = 0x4, scoped, tag = 'scoped memory for tpu_custom_call.1']
    #allocation5 [shape = 'u8[8192]{0}', space=vmem, size = 0x2000, scoped, tag = 'output window, operand 0, single buffered']
    %6 = vsyncpa [#allocation3], 0
    %7 = vsyncpa [#allocation4], 0
    // Predicated region
    $region2: #{tpu_custom_call.1} parent=1 // pred_check
      _
    $region3: #{tpu_custom_call.1} parent=1 // pred_check_branch
      %9 = sbr.rel (0) target = $region5
    $region4: #{tpu_custom_call.1} parent=1 // pred_region
      %s11 = ssub.s32 256, 256
      %12 = vsyncadd [#allocation3], %s11
      %s14 = sshll.u32 [#allocation2], 4
      %s15 = int_to_ptr.vmem [resolvable:$true] %s14
      %17 = dma.hbm_to_vmem [thread:$0]  %s0, 256, %s15, [#allocation3]
    $region5: #{tpu_custom_call.1} parent=1 // pred_fallthru
      _
    // Predicated region
    $region6: #{tpu_custom_call.1} parent=1 // pred_check
      _
    $region7: #{tpu_custom_call.1} parent=1 // pred_check_branch
      %19 = sbr.rel (0) target = $region9
    $region8: #{tpu_custom_call.1} parent=1 // pred_region
      %20 = dma.done [#allocation3], 256
    $region9: #{tpu_custom_call.1} parent=1 // pred_fallthru
      _
    %v21 = vld [vmem:[#allocation2] sm:$0xff]
    %v22 = vld [vmem:[#allocation2 + $0x8] sm:$0xff]
    %v23 = vmul.f32 %v21, 1.442695
    %v24 = vpow.pop %v23
    %v25 = vmul.f32 %v22, 1.442695
    %v26 = vpow.pop %v25
    %v27 = vmax.f32 %v24, 0.001
    %v28 = vmax.f32 %v26, 0.001
    %v29 = vmin.f32 %v27, 1000.0
    %v30 = vmin.f32 %v28, 1000.0
    %31 = vst [vmem:[#allocation5] sm:$0xff] %v29
    %32 = vst [vmem:[#allocation5 + $0x8] sm:$0xff] %v30
    // Predicated region
    $region10: #{tpu_custom_call.1} parent=1 // pred_check
      _
    $region11: #{tpu_custom_call.1} parent=1 // pred_check_branch
      %34 = sbr.rel (0) target = $region13
    $region12: #{tpu_custom_call.1} parent=1 // pred_region
      %s36 = ssub.s32 256, 256
      %37 = vsyncadd [#allocation4], %s36
      %s39 = sshll.u32 [#allocation5], 4
      %s40 = int_to_ptr.vmem [resolvable:$true] %s39
      %42 = dma.vmem_to_hbm [thread:$0]  %s40, 256, %s1, [#allocation4]
    $region13: #{tpu_custom_call.1} parent=1 // pred_fallthru
      _
    // Predicated region
    $region14: #{tpu_custom_call.1} parent=1 // pred_check
      _
    $region15: #{tpu_custom_call.1} parent=1 // pred_check_branch
      %44 = sbr.rel (0) target = $region17
    $region16: #{tpu_custom_call.1} parent=1 // pred_region
      %45 = dma.done [#allocation4], 256
    $region17: #{tpu_custom_call.1} parent=1 // pred_fallthru
      _
    %46 = vsyncpa [#allocation3], 1
    %47 = vsyncpa [#allocation4], 1

</llo_original>
